<compile_context>
chip_gen: v6e
topology: v6e:2x2x1
jax: 0.10.0
libtpu: 0.0.40
codegen_flags: <defaults>
</compile_context>

<pallas_src>
import functools
import math

import jax
import jax.numpy as jnp
from jax.experimental import pallas as pl
from jax.experimental.pallas import tpu as pltpu


_NEG_INF = -1e30  # finite mask value (avoids NaN on fully-masked rows after tiling)


# ------------------------------ in-kernel helpers ------------------------------

def _layernorm(x, w, b, eps=1e-5):
    mu = jnp.mean(x, axis=-1, keepdims=True)
    var = jnp.mean(jnp.square(x - mu), axis=-1, keepdims=True)
    return (x - mu) * jax.lax.rsqrt(var + eps) * w + b


def _gelu_tanh(x):
    c = math.sqrt(2.0 / math.pi)
    return 0.5 * x * (1.0 + jnp.tanh(c * (x + 0.044715 * x * x * x)))


# ------------------------------ tiling / compiler helpers ------------------------------

def _pick_tile(n, target):
    """Largest divisor of n that is <= target (prefer multiples of 128)."""
    if n <= target:
        return n
    for t in range(target, 0, -1):
        if n % t == 0 and t % 128 == 0:
            return t
    for t in range(target, 0, -1):
        if n % t == 0:
            return t
    return n


def _compiler_params(dimension_semantics):
    # 48 MiB scoped VMEM: above the 16/32 MiB defaults, below v7x's 64 MiB physical.
    return pltpu.CompilerParams(
        dimension_semantics=dimension_semantics,
        vmem_limit_bytes=48 * 1024 * 1024,
    )


# ------------------------------ LayerNorm + Linear (QKV proj / lm_head) ------------------------------

def _ln_linear_kernel(x_ref, lnw_ref, lnb_ref, w_ref, b_ref, o_ref):
    h = _layernorm(x_ref[...], lnw_ref[0], lnb_ref[0])              # f32 stats
    y = jnp.dot(h.astype(jnp.bfloat16), w_ref[...],
                preferred_element_type=jnp.float32)                 # bf16 MXU, f32 acc
    o_ref[...] = (y + b_ref[0]).astype(o_ref.dtype)


def ln_linear(x, ln_w, ln_b, w, b, *, out_dtype, row_tile=256, col_tile=2048):
    R, C = x.shape
    N = w.shape[1]
    tq = _pick_tile(R, row_tile)
    tn = _pick_tile(N, col_tile)
    # Grid ordering: weight-column axis outermost, row axis innermost, so each
    # (C, tn) weight block stays resident while rows stream underneath it.
    grid = (N // tn, R // tq)
    return pl.pallas_call(
        _ln_linear_kernel,
        out_shape=jax.ShapeDtypeStruct((R, N), out_dtype),
        grid=grid,
        in_specs=[
            pl.BlockSpec((tq, C), lambda j, i: (i, 0)),
            pl.BlockSpec((1, C), lambda j, i: (0, 0)),
            pl.BlockSpec((1, C), lambda j, i: (0, 0)),
            pl.BlockSpec((C, tn), lambda j, i: (0, j)),
            pl.BlockSpec((1, tn), lambda j, i: (0, j)),
        ],
        out_specs=pl.BlockSpec((tq, tn), lambda j, i: (i, j)),
        compiler_params=_compiler_params(("parallel", "parallel")),
    )(x, ln_w, ln_b, w, b)


# ------------------------------ Linear + residual (attention c_proj) ------------------------------

def _linear_residual_kernel(h_ref, w_ref, b_ref, res_ref, o_ref):
    y = jnp.dot(h_ref[...].astype(jnp.bfloat16), w_ref[...],
                preferred_element_type=jnp.float32)
    o_ref[...] = res_ref[...] + y + b_ref[0]


def linear_residual(h, w, b, res, *, row_tile=256):
    R, K = h.shape
    C = w.shape[1]
    tq = _pick_tile(R, row_tile)
    return pl.pallas_call(
        _linear_residual_kernel,
        out_shape=jax.ShapeDtypeStruct((R, C), jnp.float32),
        grid=(R // tq,),
        in_specs=[
            pl.BlockSpec((tq, K), lambda i: (i, 0)),
            pl.BlockSpec((K, C), lambda i: (0, 0)),   # constant index -> fetched once
            pl.BlockSpec((1, C), lambda i: (0, 0)),
            pl.BlockSpec((tq, C), lambda i: (i, 0)),
        ],
        out_specs=pl.BlockSpec((tq, C), lambda i: (i, 0)),
        compiler_params=_compiler_params(("parallel",)),
    )(h, w, b, res)


# ------------------------------ LayerNorm + MLP + residual ------------------------------

def _ln_mlp_residual_kernel(x_ref, lnw_ref, lnb_ref, wfc_ref, bfc_ref,
                            wpj_ref, bpj_ref, o_ref):
    x = x_ref[...]
    h = _layernorm(x, lnw_ref[0], lnb_ref[0])
    ff = jnp.dot(h.astype(jnp.bfloat16), wfc_ref[...],
                 preferred_element_type=jnp.float32) + bfc_ref[0]
    ff = _gelu_tanh(ff)
    y = jnp.dot(ff.astype(jnp.bfloat16), wpj_ref[...],
                preferred_element_type=jnp.float32) + bpj_ref[0]
    o_ref[...] = x + y


def ln_mlp_residual(x, ln_w, ln_b, w_fc, b_fc, w_pj, b_pj, *, row_tile=256):
    R, C = x.shape
    F4 = w_fc.shape[1]
    tq = _pick_tile(R, row_tile)
    return pl.pallas_call(
        _ln_mlp_residual_kernel,
        out_shape=jax.ShapeDtypeStruct((R, C), jnp.float32),
        grid=(R // tq,),
        in_specs=[
            pl.BlockSpec((tq, C), lambda i: (i, 0)),
            pl.BlockSpec((1, C), lambda i: (0, 0)),
            pl.BlockSpec((1, C), lambda i: (0, 0)),
            pl.BlockSpec((C, F4), lambda i: (0, 0)),  # bf16 weights, constant index
            pl.BlockSpec((1, F4), lambda i: (0, 0)),
            pl.BlockSpec((F4, C), lambda i: (0, 0)),
            pl.BlockSpec((1, C), lambda i: (0, 0)),
        ],
        out_specs=pl.BlockSpec((tq, C), lambda i: (i, 0)),
        compiler_params=_compiler_params(("parallel",)),
    )(x, ln_w, ln_b, w_fc, b_fc, w_pj, b_pj)


# ------------------------------ head-batched causal flash attention ------------------------------

def _flash_attn_kernel(q_ref, k_ref, v_ref, o_ref, m_sc, l_sc, acc_sc,
                       *, tq, tk, scale):
    qi = pl.program_id(1)
    ki = pl.program_id(2)

    @pl.when(ki == 0)
    def _():
        m_sc[...] = jnp.full_like(m_sc, _NEG_INF)
        l_sc[...] = jnp.zeros_like(l_sc)
        acc_sc[...] = jnp.zeros_like(acc_sc)

    # Causal: skip KV tiles entirely in the future of this Q tile.
    @pl.when(ki * tk <= qi * tq + (tq - 1))
    def _():
        q = q_ref[0].astype(jnp.bfloat16)            # [H, tq, hd]
        k = k_ref[0].astype(jnp.bfloat16)            # [H, tk, hd]
        v = v_ref[0].astype(jnp.bfloat16)            # [H, tk, hd]
        s = jnp.einsum('hqd,hkd->hqk', q, k,
                       preferred_element_type=jnp.float32) * scale
        rows = qi * tq + jax.lax.broadcasted_iota(jnp.int32, (tq, tk), 0)
        cols = ki * tk + jax.lax.broadcasted_iota(jnp.int32, (tq, tk), 1)
        s = jnp.where(rows >= cols, s, _NEG_INF)     # mask broadcasts over heads
        m_prev = m_sc[...]
        m_new = jnp.maximum(m_prev, jnp.max(s, axis=-1, keepdims=True))
        alpha = jnp.exp(m_prev - m_new)
        p = jnp.exp(s - m_new)
        l_sc[...] = alpha * l_sc[...] + jnp.sum(p, axis=-1, keepdims=True)
        acc_sc[...] = alpha * acc_sc[...] + jnp.einsum(
            'hqk,hkd->hqd', p.astype(jnp.bfloat16), v,
            preferred_element_type=jnp.float32)
        m_sc[...] = m_new

    @pl.when(ki == pl.num_programs(2) - 1)
    def _():
        inv_l = pl.reciprocal(l_sc[...], approx=True)
        o_ref[0] = (acc_sc[...] * inv_l).astype(o_ref.dtype)


def flash_attention(q, k, v, *, q_tile=256, kv_tile=256):
    B, H, T, hd = q.shape
    tq = _pick_tile(T, q_tile)
    tk = _pick_tile(T, kv_tile)
    scale = 1.0 / math.sqrt(hd)
    kernel = functools.partial(_flash_attn_kernel, tq=tq, tk=tk, scale=scale)
    return pl.pallas_call(
        kernel,
        out_shape=jax.ShapeDtypeStruct((B, H, T, hd), jnp.bfloat16),
        grid=(B, T // tq, T // tk),
        in_specs=[
            pl.BlockSpec((1, H, tq, hd), lambda b, qi, ki: (b, 0, qi, 0)),
            pl.BlockSpec((1, H, tk, hd), lambda b, qi, ki: (b, 0, ki, 0)),
            pl.BlockSpec((1, H, tk, hd), lambda b, qi, ki: (b, 0, ki, 0)),
        ],
        out_specs=pl.BlockSpec((1, H, tq, hd), lambda b, qi, ki: (b, 0, qi, 0)),
        scratch_shapes=[
            pltpu.VMEM((H, tq, 1), jnp.float32),     # running max
            pltpu.VMEM((H, tq, 1), jnp.float32),     # running denom
            pltpu.VMEM((H, tq, hd), jnp.float32),    # output accumulator
        ],
        compiler_params=_compiler_params(("parallel", "parallel", "arbitrary")),
    )(q, k, v)


# ------------------------------ transformer block ------------------------------

def run_block(x_flat, params, B, T, n_head):
    (ln1_w, ln1_b, w_qkv, b_qkv, w_apr, b_apr,
     ln2_w, ln2_b, w_fc, b_fc, w_pj, b_pj) = params
    R, C = x_flat.shape
    hd = C // n_head

    # LN1 + fused QKV projection (bf16 output feeds attention directly).
    qkv = ln_linear(x_flat, ln1_w, ln1_b, w_qkv, b_qkv, out_dtype=jnp.bfloat16)
    qkv = qkv.reshape(B, T, 3, n_head, hd)
    q = jnp.transpose(qkv[:, :, 0], (0, 2, 1, 3))    # [B, H, T, hd]
    k = jnp.transpose(qkv[:, :, 1], (0, 2, 1, 3))
    v = jnp.transpose(qkv[:, :, 2], (0, 2, 1, 3))

    # Head-batched flash attention with online softmax + causal tile skipping.
    y = flash_attention(q, k, v)
    y = jnp.transpose(y, (0, 2, 1, 3)).reshape(R, C)

    # Attention output projection + residual add.
    x_flat = linear_residual(y, w_apr, b_apr, x_flat)

    # LN2 + MLP (GELU tanh) + residual add, fused.
    x_flat = ln_mlp_residual(x_flat, ln2_w, ln2_b, w_fc, b_fc, w_pj, b_pj)
    return x_flat


# ------------------------------ full GPT forward ------------------------------

def gpt_forward(idx, params):
    wte = params['wte']                 # [V, C] f32 (embedding gather)
    wpe = params['wpe']                 # [block_size, C] f32
    B, T = idx.shape
    C = wte.shape[1]

    pos_emb = wpe[:T]
    tok_emb = jnp.take(wte, idx, axis=0) + pos_emb
    x = tok_emb + pos_emb               # reproduces the double pos-add in the reference
    x = x.reshape(B * T, C)

    for blk in params['blocks']:
        x = run_block(x, blk, B, T, params['n_head'])

    # Final LayerNorm + tied lm_head, tiled over the vocab dimension.
    logits = ln_linear(x, params['lnf_w'], params['lnf_b'],
                       params['wte_t'], params['lm_bias'],
                       out_dtype=jnp.float32, col_tile=2048)
    V = params['wte_t'].shape[1]
    logits = logits.reshape(B, T, V)
    loss = None                         # targets=None path
    # TODO(synk): cross-entropy loss (targets given) and configure_optimizers /
    # AdamW are training-only and not part of the forward kernel work.
    return logits, loss


# ------------------------------ parameter init (deterministic, synthetic) ------------------------------

def init_params(key, vocab_size, block_size, n_layer, n_head, n_embd):
    C = n_embd
    std = 0.02
    proj_std = 0.02 * (2 * n_layer) ** (-0.5)

    def nrm(k, shape, s, dtype=jnp.float32):
        return (jax.random.normal(k, shape, jnp.float32) * s).astype(dtype)

    keys = jax.random.split(key, 2 + n_layer)
    wte = nrm(keys[0], (vocab_size, C), std)          # f32 for the gather
    wpe = nrm(keys[1], (block_size, C), std)

    blocks = []
    for l in range(n_layer):
        k0, k1, k2, k3, k4, k5 = jax.random.split(keys[2 + l], 6)
        blocks.append((
            jnp.ones((1, C), jnp.float32),                      # ln_1 weight
            jnp.zeros((1, C), jnp.float32),                     # ln_1 bias
            nrm(k0, (C, 3 * C), std, jnp.bfloat16),             # c_attn W (in, out), bf16
            nrm(k1, (1, 3 * C), std),                           # c_attn bias
            nrm(k2, (C, C), proj_std, jnp.bfloat16),            # attn c_proj W (SCALE_INIT)
            jnp.zeros((1, C), jnp.float32),                     # attn c_proj bias
            jnp.ones((1, C), jnp.float32),                      # ln_2 weight
            jnp.zeros((1, C), jnp.float32),                     # ln_2 bias
            nrm(k3, (C, 4 * C), std, jnp.bfloat16),             # mlp c_fc W
            nrm(k4, (1, 4 * C), std),                           # mlp c_fc bias
            nrm(k5, (4 * C, C), proj_std, jnp.bfloat16),        # mlp c_proj W (SCALE_INIT)
            jnp.zeros((1, C), jnp.float32),                     # mlp c_proj bias
        ))

    return {
        'wte': wte,
        'wpe': wpe,
        'wte_t': wte.T.astype(jnp.bfloat16),        # pre-transposed once (tied lm_head)
        'lm_bias': jnp.zeros((1, vocab_size), jnp.float32),   # lm_head has no bias
        'blocks': blocks,
        'lnf_w': jnp.ones((1, C), jnp.float32),
        'lnf_b': jnp.zeros((1, C), jnp.float32),
        'n_head': n_head,
    }


# ------------------------------ main ------------------------------

if __name__ == "__main__":
    # small config consistent with GPTConfig
    vocab_size = 128
    block_size = 16
    n_layer = 2
    n_head = 2
    n_embd = 32
    B, T = 2, 8

    key = jax.random.PRNGKey(0)
    k_param, k_idx = jax.random.split(key)
    params = init_params(k_param, vocab_size, block_size, n_layer, n_head, n_embd)
    idx = jax.random.randint(k_idx, (B, T), 0, vocab_size, dtype=jnp.int32)

    logits, loss = gpt_forward(idx, params)
    logits = jax.block_until_ready(logits)
    assert logits.shape == (B, T, vocab_size)
    assert logits.dtype == jnp.float32
    assert bool(jnp.all(jnp.isfinite(logits)))
    print("KERNEL_OK")
</pallas_src>

<mosaic_0001>
module attributes {stable_mosaic.version = 11 : i64} {
  func.func @_ln_linear_kernel(%arg0: i32, %arg1: i32, %arg2: memref<16x32xf32, #tpu.memory_space<vmem>>, %arg3: memref<1x32xf32, #tpu.memory_space<vmem>>, %arg4: memref<1x32xf32, #tpu.memory_space<vmem>>, %arg5: memref<32x96xbf16, #tpu.memory_space<vmem>>, %arg6: memref<1x96xf32, #tpu.memory_space<vmem>>, %arg7: memref<16x96xbf16, #tpu.memory_space<vmem>>) attributes {dimension_semantics = [#tpu.dimension_semantics<parallel>, #tpu.dimension_semantics<parallel>], iteration_bounds = array<i64: 1, 1>, scalar_prefetch = 0 : i64, scratch_operands = 0 : i64, tpu.core_type = #tpu.core_type<tc>, window_params = [{transform_indices = @transform_0, window_bounds = array<i64: 16, 32>}, {pipeline_mode = #tpu.pipeline_mode<synchronous>, transform_indices = @transform_1, window_bounds = array<i64: 1, 32>}, {pipeline_mode = #tpu.pipeline_mode<synchronous>, transform_indices = @transform_2, window_bounds = array<i64: 1, 32>}, {transform_indices = @transform_3, window_bounds = array<i64: 32, 96>}, {transform_indices = @transform_4, window_bounds = array<i64: 1, 96>}, {transform_indices = @transform_5, window_bounds = array<i64: 16, 96>}]} {
    %c0 = arith.constant 0 : index
    %c0_0 = arith.constant 0 : index
    %0 = vector.load %arg2[%c0, %c0_0] : memref<16x32xf32, #tpu.memory_space<vmem>>, vector<16x32xf32>
    %c0_1 = arith.constant 0 : index
    %c0_2 = arith.constant 0 : index
    %1 = vector.load %arg3[%c0_1, %c0_2] : memref<1x32xf32, #tpu.memory_space<vmem>>, vector<1x32xf32>
    %2 = vector.shape_cast %1 : vector<1x32xf32> to vector<32xf32>
    %c0_3 = arith.constant 0 : index
    %c0_4 = arith.constant 0 : index
    %3 = vector.load %arg4[%c0_3, %c0_4] : memref<1x32xf32, #tpu.memory_space<vmem>>, vector<1x32xf32>
    %4 = vector.shape_cast %3 : vector<1x32xf32> to vector<32xf32>
    %cst = arith.constant dense<0.000000e+00> : vector<16xf32>
    %5 = vector.multi_reduction <add>, %0, %cst [1] : vector<16x32xf32> to vector<16xf32>
    %6 = vector.shape_cast %5 : vector<16xf32> to vector<16x1xf32>
    %cst_5 = arith.constant 3.200000e+01 : f32
    %7 = vector.broadcast %cst_5 : f32 to vector<16x1xf32>
    %8 = arith.divf %6, %7 : vector<16x1xf32>
    %9 = vector.broadcast %8 : vector<16x1xf32> to vector<16x32xf32>
    %10 = arith.subf %0, %9 : vector<16x32xf32>
    %11 = arith.mulf %10, %10 : vector<16x32xf32>
    %cst_6 = arith.constant dense<0.000000e+00> : vector<16xf32>
    %12 = vector.multi_reduction <add>, %11, %cst_6 [1] : vector<16x32xf32> to vector<16xf32>
    %13 = vector.shape_cast %12 : vector<16xf32> to vector<16x1xf32>
    %cst_7 = arith.constant 3.200000e+01 : f32
    %14 = vector.broadcast %cst_7 : f32 to vector<16x1xf32>
    %15 = arith.divf %13, %14 : vector<16x1xf32>
    %16 = vector.broadcast %8 : vector<16x1xf32> to vector<16x32xf32>
    %17 = arith.subf %0, %16 : vector<16x32xf32>
    %cst_8 = arith.constant 9.99999974E-6 : f32
    %18 = vector.broadcast %cst_8 : f32 to vector<16x1xf32>
    %19 = arith.addf %15, %18 : vector<16x1xf32>
    %20 = math.rsqrt %19 : vector<16x1xf32>
    %21 = vector.broadcast %20 : vector<16x1xf32> to vector<16x32xf32>
    %22 = arith.mulf %17, %21 : vector<16x32xf32>
    %23 = vector.shape_cast %2 : vector<32xf32> to vector<1x32xf32>
    %24 = vector.broadcast %23 : vector<1x32xf32> to vector<16x32xf32>
    %25 = arith.mulf %22, %24 : vector<16x32xf32>
    %26 = vector.shape_cast %4 : vector<32xf32> to vector<1x32xf32>
    %27 = vector.broadcast %26 : vector<1x32xf32> to vector<16x32xf32>
    %28 = arith.addf %25, %27 : vector<16x32xf32>
    %29 = arith.truncf %28 : vector<16x32xf32> to vector<16x32xbf16>
    %c0_9 = arith.constant 0 : index
    %c0_10 = arith.constant 0 : index
    %30 = vector.load %arg5[%c0_9, %c0_10] : memref<32x96xbf16, #tpu.memory_space<vmem>>, vector<32x96xbf16>
    %cst_11 = arith.constant dense<0.000000e+00> : vector<16x96xf32>
    %31 = tpu.matmul %29, %30, %cst_11 {dimension_numbers = #tpu.dot_dimension_numbers<[1], [0], [0], [1], [0, 0, 1, 1], [], []>} : vector<16x32xbf16>, vector<32x96xbf16>, vector<16x96xf32> -> vector<16x96xf32>
    %c0_12 = arith.constant 0 : index
    %c0_13 = arith.constant 0 : index
    %32 = vector.load %arg6[%c0_12, %c0_13] : memref<1x96xf32, #tpu.memory_space<vmem>>, vector<1x96xf32>
    %33 = vector.shape_cast %32 : vector<1x96xf32> to vector<96xf32>
    %34 = vector.shape_cast %33 : vector<96xf32> to vector<1x96xf32>
    %35 = vector.broadcast %34 : vector<1x96xf32> to vector<16x96xf32>
    %36 = arith.addf %31, %35 : vector<16x96xf32>
    %37 = arith.truncf %36 : vector<16x96xf32> to vector<16x96xbf16>
    %c0_14 = arith.constant 0 : index
    %c0_15 = arith.constant 0 : index
    %38 = vector.load %arg7[%c0_14, %c0_15] : memref<16x96xbf16, #tpu.memory_space<vmem>>, vector<16x96xbf16>
    tpu.vector_store %arg7[%c0_14, %c0_15], %37 {strides = array<i32>} : memref<16x96xbf16, #tpu.memory_space<vmem>>, vector<16x96xbf16>,
    return
  }
  func.func @transform_0(%arg0: i32, %arg1: i32) -> (i32, i32) {
    %c0_i32 = arith.constant 0 : i32
    %c0_i32_0 = arith.constant 0 : i32
    return %arg1, %c0_i32 : i32, i32
  }
  func.func @transform_1(%arg0: i32, %arg1: i32) -> (i32, i32) {
    %c0_i32 = arith.constant 0 : i32
    %c0_i32_0 = arith.constant 0 : i32
    %c0_i32_1 = arith.constant 0 : i32
    return %c0_i32, %c0_i32_0 : i32, i32
  }
  func.func @transform_2(%arg0: i32, %arg1: i32) -> (i32, i32) {
    %c0_i32 = arith.constant 0 : i32
    %c0_i32_0 = arith.constant 0 : i32
    %c0_i32_1 = arith.constant 0 : i32
    return %c0_i32, %c0_i32_0 : i32, i32
  }
  func.func @transform_3(%arg0: i32, %arg1: i32) -> (i32, i32) {
    %c0_i32 = arith.constant 0 : i32
    %c0_i32_0 = arith.constant 0 : i32
    return %c0_i32, %arg0 : i32, i32
  }
  func.func @transform_4(%arg0: i32, %arg1: i32) -> (i32, i32) {
    %c0_i32 = arith.constant 0 : i32
    %c0_i32_0 = arith.constant 0 : i32
    return %c0_i32, %arg0 : i32, i32
  }
  func.func @transform_5(%arg0: i32, %arg1: i32) -> (i32, i32) {
    %c0_i32 = arith.constant 0 : i32
    return %arg1, %arg0 : i32, i32
  }
}

</mosaic_0001>

<llo_original>
// kernel: tpu_custom_call.1
$region0: #{tpu_custom_call.1}
  #allocation0 [shape = 'u32[]', space=smem, size = 0x4, offset = 0x4, fixed_abs, tag = 'smem constant byte address 0x4 - core index']
  #allocation1 [shape = 'u32[144,128]{1,0:T(1,128)}', space=vmem, size = 0x12000, scoped, tag = 'internal scratch']
  %s0 = inlined_call_operand.hbm [shape: f32[16,32], index: 0, kind: input, shape index: {}]
  %s1 = inlined_call_operand.vmem [shape: f32[1,32], index: 1, kind: input, shape index: {}]
  %s2 = inlined_call_operand.vmem [shape: f32[1,32], index: 2, kind: input, shape index: {}]
  %s3 = inlined_call_operand.hbm [shape: bf16[32,96], index: 3, kind: input, shape index: {}]
  %s4 = inlined_call_operand.vmem [shape: f32[1,96], index: 4, kind: input, shape index: {}]
  %s5 = inlined_call_operand.hbm [shape: bf16[16,96], index: 5, kind: output, shape index: {}]
  %s6 = sld [smem:[#allocation0]]
  $region38: #{tpu_custom_call.1} parent=0
    _
  %s8 = ssub.s32 1, %s6
  %s9 = scalar_select 0, %s8, %s6
  $region1: #{tpu_custom_call.1} parent=0
    #allocation2 [shape = 'u8[8192]{0}', space=vmem, size = 0x2000, scoped, tag = 'input window, operand 0, single buffered']
    #allocation3 [shape = 's32[1]{0}', space=sflag, size = 0x4, scoped, tag = 'scoped memory for tpu_custom_call.1']
    #allocation4 [shape = 's32[1]{0}', space=sflag, size = 0x4, scoped, tag = 'scoped memory for tpu_custom_call.1']
    #allocation5 [shape = 'u8[8192]{0}', space=vmem, size = 0x2000, scoped, tag = 'input window, operand 3, single buffered']
    #allocation6 [shape = 's32[1]{0}', space=sflag, size = 0x4, scoped, tag = 'scoped memory for tpu_custom_call.1']
    #allocation7 [shape = 'u8[4096]{0}', space=vmem, size = 0x1000, scoped, tag = 'output window, operand 0, single buffered']
    %10 = vsyncpa [#allocation3], 0
    %11 = vsyncpa [#allocation6], 0
    %12 = vsyncpa [#allocation4], 0
    // Predicated region
    $region2: #{tpu_custom_call.1} parent=1 // pred_check
      _
    $region3: #{tpu_custom_call.1} parent=1 // pred_check_branch
      %14 = sbr.rel (0) target = $region5
    $region4: #{tpu_custom_call.1} parent=1 // pred_region
      %s16 = ssub.s32 256, 256
      %17 = vsyncadd [#allocation3], %s16
      %s18 = sshll.u32 [#allocation2], 4
      %s19 = int_to_ptr.vmem [resolvable:$true] %s18
      %24 = dma.hbm_to_vmem [thread:$0]  %s0, 256, %s19, [#allocation3], 128, 128, 8
    $region5: #{tpu_custom_call.1} parent=1 // pred_fallthru
      _
    // Predicated region
    $region6: #{tpu_custom_call.1} parent=1 // pred_check
      _
    $region7: #{tpu_custom_call.1} parent=1 // pred_check_branch
      %26 = sbr.rel (0) target = $region9
    $region8: #{tpu_custom_call.1} parent=1 // pred_region
      _
    $region9: #{tpu_custom_call.1} parent=1 // pred_fallthru
      _
    // Predicated region
    $region10: #{tpu_custom_call.1} parent=1 // pred_check
      _
    $region11: #{tpu_custom_call.1} parent=1 // pred_check_branch
      %28 = sbr.rel (0) target = $region13
    $region12: #{tpu_custom_call.1} parent=1 // pred_region
      _
    $region13: #{tpu_custom_call.1} parent=1 // pred_fallthru
      _
    // Predicated region
    $region14: #{tpu_custom_call.1} parent=1 // pred_check
      _
    $region15: #{tpu_custom_call.1} parent=1 // pred_check_branch
      %30 = sbr.rel (0) target = $region17
    $region16: #{tpu_custom_call.1} parent=1 // pred_region
      %s32 = ssub.s32 256, 256
      %33 = vsyncadd [#allocation6], %s32
      %s34 = sshll.u32 [#allocation5], 4
      %s35 = int_to_ptr.vmem [resolvable:$true] %s34
      %40 = dma.hbm_to_vmem [thread:$0]  %s3, 256, %s35, [#allocation6], 64, 64, 4
    $region17: #{tpu_custom_call.1} parent=1 // pred_fallthru
      _
    // Predicated region
    $region18: #{tpu_custom_call.1} parent=1 // pred_check
      _
    $region19: #{tpu_custom_call.1} parent=1 // pred_check_branch
      %42 = sbr.rel (0) target = $region21
    $region20: #{tpu_custom_call.1} parent=1 // pred_region
      _
    $region21: #{tpu_custom_call.1} parent=1 // pred_fallthru
      _
    // Predicated region
    $region22: #{tpu_custom_call.1} parent=1 // pred_check
      _
    $region23: #{tpu_custom_call.1} parent=1 // pred_check_branch
      %44 = sbr.rel (0) target = $region25
    $region24: #{tpu_custom_call.1} parent=1 // pred_region
      %45 = dma.done [#allocation3], 256
    $region25: #{tpu_custom_call.1} parent=1 // pred_fallthru
      _
    // Predicated region
    $region26: #{tpu_custom_call.1} parent=1 // pred_check
      _
    $region27: #{tpu_custom_call.1} parent=1 // pred_check_branch
      %47 = sbr.rel (0) target = $region29
    $region28: #{tpu_custom_call.1} parent=1 // pred_region
      %48 = dma.done [#allocation6], 256
    $region29: #{tpu_custom_call.1} parent=1 // pred_fallthru
      _
    %v50 = vld [vmem:[#allocation2] sm:$0xff]
    %v51 = vld [vmem:[#allocation2 + $0x8] sm:$0xff]
    %v52 = vld [vmem:[%s1] sm:$0x1]
    %v53 = vld [vmem:[%s2] sm:$0x1]
    %vm54 = vcmask 261120
    %v55 = vsel %vm54, %v50, 0.0
    %56 = vadd.xlane.f32.xlu0 %v55
    %v57 = vpop.xlane.xlu0 %56
    %v58 = vsel %vm54, %v51, 0.0
    %59 = vadd.xlane.f32.xlu0 %v58
    %v60 = vpop.xlane.xlu0 %59
    %v61 = vrcp.pop 32.0
    %v62 = vmul.f32 %v57, %v61
    %v63 = vmul.f32 %v60, %v61
    %v64 = vsub.f32 %v50, %v62
    %v65 = vsub.f32 %v51, %v63
    %v66 = vmul.f32 %v64, %v64
    %v67 = vmul.f32 %v65, %v65
    %v68 = vsel %vm54, %v66, 0.0
    %69 = vadd.xlane.f32.xlu0 %v68
    %v70 = vpop.xlane.xlu0 %69
    %v71 = vsel %vm54, %v67, 0.0
    %72 = vadd.xlane.f32.xlu0 %v71
    %v73 = vpop.xlane.xlu0 %72
    %v74 = vmul.f32 %v70, %v61
    %v75 = vmul.f32 %v73, %v61
    %v76 = vadd.f32 %v74, 1e-05
    %v77 = vadd.f32 %v75, 1e-05
    %v78 = vrsqrt.pop %v76
    %v79 = vrsqrt.pop %v77
    %v80 = vmul.f32 %v64, %v78
    %v81 = vmul.f32 %v65, %v79
    %v83 = vlaneseq
    %v84 = vshrl.u32 %v83, 7
    %v85 = vsub.s32 0, %v84
    %v86 = vrot.slane %v52, %v85
    %v88 = vmul.f32 %v80, %v86
    %v89 = vmul.f32 %v81, %v86
    %v91 = vlaneseq
    %v92 = vshrl.u32 %v91, 7
    %v93 = vsub.s32 0, %v92
    %v94 = vrot.slane %v53, %v93
    %v96 = vadd.f32 %v88, %v94
    %v97 = vadd.f32 %v89, %v94
    %v98 = vpack.c.bf16 %v97, %v96
    %v99 = vld [vmem:[#allocation5] sm:$0xf]
    %v100 = vld [vmem:[#allocation5 + $0x4] sm:$0xf]
    %v101 = vld [vmem:[#allocation5 + $0x8] sm:$0xf]
    %v102 = vld [vmem:[#allocation5 + $0xc] sm:$0xf]
    %v103 = vld [vmem:[%s4] sm:$0x1]
    %v105 = vlaneseq
    %v106 = vshrl.u32 %v105, 7
    %v107 = vsub.s32 0, %v106
    %v108 = vrot.slane %v103, %v107
    %v114 = vunpack.c.l.b16 %v99
    %v115 = vunpack.c.l.b16 %v100
    %v116 = vunpack.c.l.b16 %v101
    %v117 = vunpack.c.l.b16 %v102
    %v118 = vpack.c.b16 %v115, %v114
    %v119 = vpack.c.b16 %v117, %v116
    %v123 = vsel %vm54, %v98, 0
    %125 = vmatprep.subr.bf16.mxu0 0
    %126 = vmatpush1.bf16.msra.mxu0 0
    %127 = vmatprep.subr.bf16.mxu0 0
    %128 = vmatpush1.bf16.msra.mxu0 0
    %129 = vmatprep.subr.bf16.mxu0 0
    %130 = vmatpush1.bf16.msra.mxu0 0
    %131 = vmatprep.subr.bf16.mxu0 0
    %132 = vmatpush1.bf16.msra.mxu0 0
    %133 = vmatprep.subr.bf16.mxu0 0
    %134 = vmatpush1.bf16.msra.mxu0 0
    %135 = vmatprep.subr.bf16.mxu0 0
    %136 = vmatpush1.bf16.msra.mxu0 0
    %137 = vmatprep.subr.bf16.mxu0 0
    %138 = vmatpush1.bf16.msra.mxu0 %v119
    %139 = vmatprep.subr.bf16.mxu0 0
    %140 = vmatpush1.bf16.msra.mxu0 %v118
    %141 = vmatprep.subr.bf16.mxu0 0
    %142 = vmatpush2.bf16.msra.mxu0 0
    %143 = vmatprep.subr.bf16.mxu0 0
    %144 = vmatpush2.bf16.msra.mxu0 0
    %145 = vmatprep.subr.bf16.mxu0 0
    %146 = vmatpush2.bf16.msra.mxu0 0
    %147 = vmatprep.subr.bf16.mxu0 0
    %148 = vmatpush2.bf16.msra.mxu0 0
    %149 = vmatprep.subr.bf16.mxu0 0
    %150 = vmatpush2.bf16.msra.mxu0 0
    %151 = vmatprep.subr.bf16.mxu0 0
    %152 = vmatpush2.bf16.msra.mxu0 0
    %153 = vmatprep.subr.bf16.mxu0 0
    %154 = vmatpush2.bf16.msra.mxu0 0
    %155 = vmatprep.subr.bf16.mxu0 0
    %156 = vmatpush2.bf16.msra.mxu0 0
    %157 = vmatprep.mubr.bf16.mxu0 0
    %158 = vmatmul.mubr.bf16.gmra.mxu0 %v123
    %v159 = vpop.f32.mrf.mxu0
    %v160 = vadd.f32 %v108, %v159
    %v161 = vpop.f32.mrf.mxu0
    %v162 = vpop.f32.mrf.mxu0
    %v163 = vadd.f32 %v108, %v162
    %v164 = vpop.f32.mrf.mxu0
    %165 = vdwg.mxu0
    %v166 = vpack.c.bf16 %v163, %v160
    %v168 = vunpack.c.l.b16 %v166
    %v169 = vunpack.c.h.b16 %v166
    %v170 = vpack.c.b16 %v168, %v168
    %v171 = vpack.c.b16 %v169, %v169
    %vm174 = vcmask 781312
    %175 = vst.msk [vmem:[#allocation7] sm:$0xf] %vm174, %v170
    %176 = vst.msk [vmem:[#allocation7 + $0x4] sm:$0xf] %vm174, %v171
    // Predicated region
    $region30: #{tpu_custom_call.1} parent=1 // pred_check
      _
    $region31: #{tpu_custom_call.1} parent=1 // pred_check_branch
      %178 = sbr.rel (0) target = $region33
    $region32: #{tpu_custom_call.1} parent=1 // pred_region
      %s180 = ssub.s32 128, 128
      %181 = vsyncadd [#allocation4], %s180
      %s182 = sshll.u32 [#allocation7], 4
      %s183 = int_to_ptr.vmem [resolvable:$true] %s182
      %188 = dma.vmem_to_hbm [thread:$0]  %s183, 128, %s5, [#allocation4], 64, 64, 4
    $region33: #{tpu_custom_call.1} parent=1 // pred_fallthru
      _
    // Predicated region
    $region34: #{tpu_custom_call.1} parent=1 // pred_check
      _
    $region35: #{tpu_custom_call.1} parent=1 // pred_check_branch
      %190 = sbr.rel (0) target = $region37
    $region36: #{tpu_custom_call.1} parent=1 // pred_region
      %191 = dma.done [#allocation4], 128
    $region37: #{tpu_custom_call.1} parent=1 // pred_fallthru
      _
    %192 = vsyncpa [#allocation3], 1
    %193 = vsyncpa [#allocation6], 1
    %194 = vsyncpa [#allocation4], 1

</llo_original>
